<compile_context>
chip_gen: v6e
topology: v6e:2x2x1
jax: 0.10.0
libtpu: 0.0.40
codegen_flags: <defaults>
</compile_context>

<pallas_src>
import jax
import jax.numpy as jnp
from jax.experimental import pallas as pl
from jax.experimental.pallas import tpu as pltpu


def actor_net_kernel(x_ref, w1_ref, b1_ref, w2_ref, b2_ref, out_ref):
    # fc1 + ReLU  (MXU matmul, f32 accumulation)
    x = x_ref[...]
    h = jnp.dot(x, w1_ref[...], preferred_element_type=jnp.float32) + b1_ref[...]
    h = jnp.maximum(h, 0.0)

    # fc2
    logits = jnp.dot(h, w2_ref[...], preferred_element_type=jnp.float32) + b2_ref[...]

    # softmax over dim=1 (action axis = last dim), numerically stable.
    m = jnp.max(logits, axis=-1, keepdims=True)
    e = jnp.exp(logits - m)
    denom = jnp.sum(e, axis=-1, keepdims=True)
    probs = e * pl.reciprocal(denom, approx=True)  # EUP vrcp, ~free
    out_ref[...] = probs.astype(out_ref.dtype)


def prepare_actor_params(w1, b1, w2, b2):
    """One-time parameter prep (do this at model-init, NOT per forward call).

    Takes PyTorch nn.Linear-convention params:
      w1: (hidden, state_dim), b1: (hidden,), w2: (action, hidden), b2: (action,)
    Returns kernel-ready params: weights transposed to (in, out), biases (1, out).
    """
    w1_t = jnp.asarray(w1, jnp.float32).T          # (state_dim, hidden)
    b1_2d = jnp.asarray(b1, jnp.float32)[None, :]  # (1, hidden)
    w2_t = jnp.asarray(w2, jnp.float32).T          # (hidden, action)
    b2_2d = jnp.asarray(b2, jnp.float32)[None, :]  # (1, action)
    return w1_t, b1_2d, w2_t, b2_2d


def actor_net_forward(state, w1_t, b1_2d, w2_t, b2_2d, *, block_b=512):
    """state: (B, state_dim) f32. Params as produced by prepare_actor_params."""
    x = jnp.asarray(state, jnp.float32)
    B, state_dim = x.shape
    hidden_dim = w1_t.shape[1]
    action_dim = w2_t.shape[1]

    # Batch tile: multiple of 8 (sublane granularity), capped at block_b.
    # Pad the batch so every grid step sees a full tile (padded rows are zeros;
    # their softmax output is discarded below).
    tb = min(block_b, max(8, ((B + 7) // 8) * 8))
    b_pad = ((B + tb - 1) // tb) * tb
    if b_pad != B:
        x = jnp.pad(x, ((0, b_pad - B), (0, 0)))
    grid = (b_pad // tb,)

    flops = 2 * b_pad * (state_dim * hidden_dim + hidden_dim * action_dim)
    bytes_accessed = 4 * (
        b_pad * state_dim            # x in
        + b_pad * action_dim         # probs out
        + state_dim * hidden_dim + hidden_dim   # fc1 params
        + hidden_dim * action_dim + action_dim  # fc2 params
    )

    out = pl.pallas_call(
        actor_net_kernel,
        out_shape=jax.ShapeDtypeStruct((b_pad, action_dim), jnp.float32),
        grid_spec=pltpu.PrefetchScalarGridSpec(
            num_scalar_prefetch=0,
            grid=grid,
            in_specs=[
                # Batch-tiled activations.
                pl.BlockSpec((tb, state_dim), lambda i: (i, 0)),
                # Weights/biases: same block every step -> DMA'd once, stay resident.
                pl.BlockSpec((state_dim, hidden_dim), lambda i: (0, 0)),
                pl.BlockSpec((1, hidden_dim), lambda i: (0, 0)),
                pl.BlockSpec((hidden_dim, action_dim), lambda i: (0, 0)),
                pl.BlockSpec((1, action_dim), lambda i: (0, 0)),
            ],
            out_specs=pl.BlockSpec((tb, action_dim), lambda i: (i, 0)),
        ),
        compiler_params=pltpu.CompilerParams(
            dimension_semantics=("parallel",),  # shard batch axis across TCs (v7x)
        ),
        cost_estimate=pl.CostEstimate(
            flops=flops,
            transcendentals=b_pad * action_dim,  # exp in softmax
            bytes_accessed=bytes_accessed,
        ),
    )(x, w1_t, b1_2d, w2_t, b2_2d)

    return out[:B] if b_pad != B else out


if __name__ == "__main__":
    # Small shapes consistent with ActorNet(state_dim, hidden_dim, action_dim)
    batch, state_dim, hidden_dim, action_dim = 8, 16, 32, 4

    key = jax.random.PRNGKey(0)
    k1, k2, k3, k4, k5 = jax.random.split(key, 5)

    # Deterministic synthetic parameters (PyTorch nn.Linear weight/bias shapes)
    w1 = jax.random.normal(k1, (hidden_dim, state_dim), jnp.float32) * 0.1
    b1 = jax.random.normal(k2, (hidden_dim,), jnp.float32) * 0.1
    w2 = jax.random.normal(k3, (action_dim, hidden_dim), jnp.float32) * 0.1
    b2 = jax.random.normal(k4, (action_dim,), jnp.float32) * 0.1
    state = jax.random.normal(k5, (batch, state_dim), jnp.float32)

    # One-time param prep (hoisted out of the forward path).
    params = prepare_actor_params(w1, b1, w2, b2)

    # Small-batch run (single 8-row tile).
    probs = actor_net_forward(state, *params)
    probs = jax.block_until_ready(probs)

    # Reference check in plain JAX (same math as the PyTorch module).
    # approx reciprocal -> loosen tolerances to ~1e-3 scale.
    h_ref = jnp.maximum(state @ w1.T + b1, 0.0)
    ref = jax.nn.softmax(h_ref @ w2.T + b2, axis=1)
    assert probs.shape == (batch, action_dim)
    assert jnp.allclose(probs, ref, atol=5e-3), "mismatch vs reference (small batch)"
    assert jnp.allclose(jnp.sum(probs, axis=1), 1.0, atol=5e-3)

    # Larger, non-multiple-of-tile batch to exercise the grid + padding path.
    big_batch = 600  # -> tb=512, padded to 1024, grid=(2,)
    state_big = jax.random.normal(jax.random.PRNGKey(1), (big_batch, state_dim), jnp.float32)
    probs_big = jax.block_until_ready(actor_net_forward(state_big, *params))
    h_big = jnp.maximum(state_big @ w1.T + b1, 0.0)
    ref_big = jax.nn.softmax(h_big @ w2.T + b2, axis=1)
    assert probs_big.shape == (big_batch, action_dim)
    assert jnp.allclose(probs_big, ref_big, atol=5e-3), "mismatch vs reference (big batch)"
    assert jnp.allclose(jnp.sum(probs_big, axis=1), 1.0, atol=5e-3)

    print("KERNEL_OK")
</pallas_src>

<mosaic_0001>
module attributes {stable_mosaic.version = 11 : i64} {
  func.func @actor_net_kernel(%arg0: i32, %arg1: memref<8x16xf32, #tpu.memory_space<vmem>>, %arg2: memref<16x32xf32, #tpu.memory_space<vmem>>, %arg3: memref<1x32xf32, #tpu.memory_space<vmem>>, %arg4: memref<32x4xf32, #tpu.memory_space<vmem>>, %arg5: memref<1x4xf32, #tpu.memory_space<vmem>>, %arg6: memref<8x4xf32, #tpu.memory_space<vmem>>) attributes {dimension_semantics = [#tpu.dimension_semantics<parallel>], iteration_bounds = array<i64: 1>, scalar_prefetch = 0 : i64, scratch_operands = 0 : i64, tpu.core_type = #tpu.core_type<tc>, window_params = [{transform_indices = @transform_0, window_bounds = array<i64: 8, 16>}, {pipeline_mode = #tpu.pipeline_mode<synchronous>, transform_indices = @transform_1, window_bounds = array<i64: 16, 32>}, {pipeline_mode = #tpu.pipeline_mode<synchronous>, transform_indices = @transform_2, window_bounds = array<i64: 1, 32>}, {pipeline_mode = #tpu.pipeline_mode<synchronous>, transform_indices = @transform_3, window_bounds = array<i64: 32, 4>}, {pipeline_mode = #tpu.pipeline_mode<synchronous>, transform_indices = @transform_4, window_bounds = array<i64: 1, 4>}, {transform_indices = @transform_5, window_bounds = array<i64: 8, 4>}]} {
    %c0 = arith.constant 0 : index
    %c0_0 = arith.constant 0 : index
    %0 = vector.load %arg1[%c0, %c0_0] : memref<8x16xf32, #tpu.memory_space<vmem>>, vector<8x16xf32>
    %c0_1 = arith.constant 0 : index
    %c0_2 = arith.constant 0 : index
    %1 = vector.load %arg2[%c0_1, %c0_2] : memref<16x32xf32, #tpu.memory_space<vmem>>, vector<16x32xf32>
    %cst = arith.constant dense<0.000000e+00> : vector<8x32xf32>
    %2 = tpu.matmul %0, %1, %cst {dimension_numbers = #tpu.dot_dimension_numbers<[1], [0], [0], [1], [0, 0, 1, 1], [], []>} : vector<8x16xf32>, vector<16x32xf32>, vector<8x32xf32> -> vector<8x32xf32>
    %c0_3 = arith.constant 0 : index
    %c0_4 = arith.constant 0 : index
    %3 = vector.load %arg3[%c0_3, %c0_4] : memref<1x32xf32, #tpu.memory_space<vmem>>, vector<1x32xf32>
    %4 = vector.broadcast %3 : vector<1x32xf32> to vector<8x32xf32>
    %5 = arith.addf %2, %4 : vector<8x32xf32>
    %cst_5 = arith.constant 0.000000e+00 : f32
    %6 = vector.broadcast %cst_5 : f32 to vector<8x32xf32>
    %7 = arith.maximumf %5, %6 : vector<8x32xf32>
    %c0_6 = arith.constant 0 : index
    %c0_7 = arith.constant 0 : index
    %8 = vector.load %arg4[%c0_6, %c0_7] : memref<32x4xf32, #tpu.memory_space<vmem>>, vector<32x4xf32>
    %cst_8 = arith.constant dense<0.000000e+00> : vector<8x4xf32>
    %9 = tpu.matmul %7, %8, %cst_8 {dimension_numbers = #tpu.dot_dimension_numbers<[1], [0], [0], [1], [0, 0, 1, 1], [], []>} : vector<8x32xf32>, vector<32x4xf32>, vector<8x4xf32> -> vector<8x4xf32>
    %c0_9 = arith.constant 0 : index
    %c0_10 = arith.constant 0 : index
    %10 = vector.load %arg5[%c0_9, %c0_10] : memref<1x4xf32, #tpu.memory_space<vmem>>, vector<1x4xf32>
    %11 = vector.broadcast %10 : vector<1x4xf32> to vector<8x4xf32>
    %12 = arith.addf %9, %11 : vector<8x4xf32>
    %cst_11 = arith.constant dense<0xFF800000> : vector<8xf32>
    %13 = vector.multi_reduction <maximumf>, %12, %cst_11 [1] : vector<8x4xf32> to vector<8xf32>
    %14 = vector.shape_cast %13 : vector<8xf32> to vector<8x1xf32>
    %15 = vector.broadcast %14 : vector<8x1xf32> to vector<8x4xf32>
    %16 = arith.subf %12, %15 : vector<8x4xf32>
    %17 = math.exp %16 : vector<8x4xf32>
    %cst_12 = arith.constant dense<0.000000e+00> : vector<8xf32>
    %18 = vector.multi_reduction <add>, %17, %cst_12 [1] : vector<8x4xf32> to vector<8xf32>
    %19 = vector.shape_cast %18 : vector<8xf32> to vector<8x1xf32>
    %20 = tpu.reciprocal %19 {approx = true} : vector<8x1xf32> -> vector<8x1xf32>
    %21 = vector.broadcast %20 : vector<8x1xf32> to vector<8x4xf32>
    %22 = arith.mulf %17, %21 : vector<8x4xf32>
    %c0_13 = arith.constant 0 : index
    %c0_14 = arith.constant 0 : index
    %23 = vector.load %arg6[%c0_13, %c0_14] : memref<8x4xf32, #tpu.memory_space<vmem>>, vector<8x4xf32>
    tpu.vector_store %arg6[%c0_13, %c0_14], %22 {strides = array<i32>} : memref<8x4xf32, #tpu.memory_space<vmem>>, vector<8x4xf32>,
    return
  }
  func.func @transform_0(%arg0: i32) -> (i32, i32) {
    %c0_i32 = arith.constant 0 : i32
    %c0_i32_0 = arith.constant 0 : i32
    return %arg0, %c0_i32 : i32, i32
  }
  func.func @transform_1(%arg0: i32) -> (i32, i32) {
    %c0_i32 = arith.constant 0 : i32
    %c0_i32_0 = arith.constant 0 : i32
    %c0_i32_1 = arith.constant 0 : i32
    return %c0_i32, %c0_i32_0 : i32, i32
  }
  func.func @transform_2(%arg0: i32) -> (i32, i32) {
    %c0_i32 = arith.constant 0 : i32
    %c0_i32_0 = arith.constant 0 : i32
    %c0_i32_1 = arith.constant 0 : i32
    return %c0_i32, %c0_i32_0 : i32, i32
  }
  func.func @transform_3(%arg0: i32) -> (i32, i32) {
    %c0_i32 = arith.constant 0 : i32
    %c0_i32_0 = arith.constant 0 : i32
    %c0_i32_1 = arith.constant 0 : i32
    return %c0_i32, %c0_i32_0 : i32, i32
  }
  func.func @transform_4(%arg0: i32) -> (i32, i32) {
    %c0_i32 = arith.constant 0 : i32
    %c0_i32_0 = arith.constant 0 : i32
    %c0_i32_1 = arith.constant 0 : i32
    return %c0_i32, %c0_i32_0 : i32, i32
  }
  func.func @transform_5(%arg0: i32) -> (i32, i32) {
    %c0_i32 = arith.constant 0 : i32
    %c0_i32_0 = arith.constant 0 : i32
    return %arg0, %c0_i32 : i32, i32
  }
}

</mosaic_0001>

<llo_original>
// kernel: tpu_custom_call.1
$region0: #{tpu_custom_call.1}
  #allocation0 [shape = 'u32[]', space=smem, size = 0x4, offset = 0x4, fixed_abs, tag = 'smem constant byte address 0x4 - core index']
  #allocation1 [shape = 'u32[144,128]{1,0:T(1,128)}', space=vmem, size = 0x12000, scoped, tag = 'internal scratch']
  %s0 = inlined_call_operand.vmem [shape: f32[8,16], index: 0, kind: input, shape index: {}]
  %s1 = inlined_call_operand.vmem [shape: f32[16,32], index: 1, kind: input, shape index: {}]
  %s2 = inlined_call_operand.vmem [shape: f32[1,32], index: 2, kind: input, shape index: {}]
  %s3 = inlined_call_operand.vmem [shape: f32[32,4], index: 3, kind: input, shape index: {}]
  %s4 = inlined_call_operand.vmem [shape: f32[1,4], index: 4, kind: input, shape index: {}]
  %s5 = inlined_call_operand.vmem [shape: f32[8,4], index: 5, kind: output, shape index: {}]
  %s6 = sld [smem:[#allocation0]]
  $region30: #{tpu_custom_call.1} parent=0
    _
  %s8 = ssub.s32 1, %s6
  %s9 = scalar_select 0, %s8, %s6
  // Predicated region
  $region2: #{tpu_custom_call.1} parent=0 // pred_check
    _
  $region3: #{tpu_custom_call.1} parent=0 // pred_check_branch
    %11 = sbr.rel (0) target = $region5
  $region4: #{tpu_custom_call.1} parent=0 // pred_region
    _
  $region5: #{tpu_custom_call.1} parent=0 // pred_fallthru
    _
  // Predicated region
  $region6: #{tpu_custom_call.1} parent=0 // pred_check
    _
  $region7: #{tpu_custom_call.1} parent=0 // pred_check_branch
    %13 = sbr.rel (0) target = $region9
  $region8: #{tpu_custom_call.1} parent=0 // pred_region
    _
  $region9: #{tpu_custom_call.1} parent=0 // pred_fallthru
    _
  // Predicated region
  $region10: #{tpu_custom_call.1} parent=0 // pred_check
    _
  $region11: #{tpu_custom_call.1} parent=0 // pred_check_branch
    %15 = sbr.rel (0) target = $region13
  $region12: #{tpu_custom_call.1} parent=0 // pred_region
    _
  $region13: #{tpu_custom_call.1} parent=0 // pred_fallthru
    _
  // Predicated region
  $region14: #{tpu_custom_call.1} parent=0 // pred_check
    _
  $region15: #{tpu_custom_call.1} parent=0 // pred_check_branch
    %17 = sbr.rel (0) target = $region17
  $region16: #{tpu_custom_call.1} parent=0 // pred_region
    _
  $region17: #{tpu_custom_call.1} parent=0 // pred_fallthru
    _
  // Predicated region
  $region18: #{tpu_custom_call.1} parent=0 // pred_check
    _
  $region19: #{tpu_custom_call.1} parent=0 // pred_check_branch
    %19 = sbr.rel (0) target = $region21
  $region20: #{tpu_custom_call.1} parent=0 // pred_region
    _
  $region21: #{tpu_custom_call.1} parent=0 // pred_fallthru
    _
  %v20 = vld [vmem:[%s0] sm:$0xff]
  %v21 = vld [vmem:[%s1] sm:$0xff]
  %v22 = vld [vmem:[%s1 + $0x8] sm:$0xff]
  %v23 = vld [vmem:[%s2] sm:$0x1]
  %v25 = vlaneseq
  %v26 = vshrl.u32 %v25, 7
  %v27 = vsub.s32 0, %v26
  %v28 = vrot.slane %v23, %v27
  %vm30 = vcmask 130048
  %v32 = vsel %vm30, %v20, 0
  %34 = vmatprep.subr.mxu0 0.0
  %35 = vmatpush1.msra.mxu0 0.0
  %36 = vmatprep.subr.mxu0 0.0
  %37 = vmatpush1.msra.mxu0 0.0
  %38 = vmatprep.subr.mxu0 0.0
  %39 = vmatpush1.msra.mxu0 0.0
  %40 = vmatprep.subr.mxu0 0.0
  %41 = vmatpush1.msra.mxu0 0.0
  %42 = vmatprep.subr.mxu0 0.0
  %43 = vmatpush1.msra.mxu0 0.0
  %44 = vmatprep.subr.mxu0 0.0
  %45 = vmatpush1.msra.mxu0 0.0
  %46 = vmatprep.subr.mxu0 0.0
  %47 = vmatpush1.msra.mxu0 0.0
  %48 = vmatprep.subr.mxu0 0.0
  %49 = vmatpush1.msra.mxu0 0.0
  %50 = vmatprep.subr.mxu0 0.0
  %51 = vmatpush1.msra.mxu0 0.0
  %52 = vmatprep.subr.mxu0 0.0
  %53 = vmatpush1.msra.mxu0 0.0
  %54 = vmatprep.subr.mxu0 0.0
  %55 = vmatpush1.msra.mxu0 0.0
  %56 = vmatprep.subr.mxu0 0.0
  %57 = vmatpush1.msra.mxu0 0.0
  %58 = vmatprep.subr.mxu0 0.0
  %59 = vmatpush1.msra.mxu0 0.0
  %60 = vmatprep.subr.mxu0 0.0
  %61 = vmatpush1.msra.mxu0 0.0
  %62 = vmatprep.subr.mxu0 0.0
  %63 = vmatpush1.msra.mxu0 %v22
  %64 = vmatprep.subr.mxu0 0.0
  %65 = vmatpush1.msra.mxu0 %v21
  %66 = vmatprep.subr.mxu0 0.0
  %67 = vmatpush2.msra.mxu0 0.0
  %68 = vmatprep.subr.mxu0 0.0
  %69 = vmatpush2.msra.mxu0 0.0
  %70 = vmatprep.subr.mxu0 0.0
  %71 = vmatpush2.msra.mxu0 0.0
  %72 = vmatprep.subr.mxu0 0.0
  %73 = vmatpush2.msra.mxu0 0.0
  %74 = vmatprep.subr.mxu0 0.0
  %75 = vmatpush2.msra.mxu0 0.0
  %76 = vmatprep.subr.mxu0 0.0
  %77 = vmatpush2.msra.mxu0 0.0
  %78 = vmatprep.subr.mxu0 0.0
  %79 = vmatpush2.msra.mxu0 0.0
  %80 = vmatprep.subr.mxu0 0.0
  %81 = vmatpush2.msra.mxu0 0.0
  %82 = vmatprep.subr.mxu0 0.0
  %83 = vmatpush2.msra.mxu0 0.0
  %84 = vmatprep.subr.mxu0 0.0
  %85 = vmatpush2.msra.mxu0 0.0
  %86 = vmatprep.subr.mxu0 0.0
  %87 = vmatpush2.msra.mxu0 0.0
  %88 = vmatprep.subr.mxu0 0.0
  %89 = vmatpush2.msra.mxu0 0.0
  %90 = vmatprep.subr.mxu0 0.0
  %91 = vmatpush2.msra.mxu0 0.0
  %92 = vmatprep.subr.mxu0 0.0
  %93 = vmatpush2.msra.mxu0 0.0
  %94 = vmatprep.subr.mxu0 0.0
  %95 = vmatpush2.msra.mxu0 0.0
  %96 = vmatprep.subr.mxu0 0.0
  %97 = vmatpush2.msra.mxu0 0.0
  %98 = vmatprep.mubr.f32.mxu0 0.0
  %99 = vmatmul.mubr.f32.gmra.mxu0 %v32
  %v100 = vpop.f32.mrf.mxu0
  %v101 = vadd.f32 %v28, %v100
  %v102 = vpop.f32.mrf.mxu0
  %103 = vdwg.mxu0
  %v104 = vmax.f32 %v101, 0.0
  %v105 = vld [vmem:[%s3] sm:$0xff]
  %v106 = vld [vmem:[%s3 + $0x8] sm:$0xff]
  %v107 = vld [vmem:[%s3 + $0x10] sm:$0xff]
  %v108 = vld [vmem:[%s3 + $0x18] sm:$0xff]
  %v109 = vld [vmem:[%s4] sm:$0x1]
  %v111 = vlaneseq
  %v112 = vshrl.u32 %v111, 7
  %v113 = vsub.s32 0, %v112
  %v114 = vrot.slane %v109, %v113
  %vm116 = vcmask 261120
  %v118 = vsel %vm116, %v104, 0
  %120 = vmatprep.subr.mxu0 0.0
  %121 = vmatpush1.msra.mxu0 0.0
  %122 = vmatprep.subr.mxu0 0.0
  %123 = vmatpush1.msra.mxu0 0.0
  %124 = vmatprep.subr.mxu0 0.0
  %125 = vmatpush1.msra.mxu0 0.0
  %126 = vmatprep.subr.mxu0 0.0
  %127 = vmatpush1.msra.mxu0 0.0
  %128 = vmatprep.subr.mxu0 0.0
  %129 = vmatpush1.msra.mxu0 0.0
  %130 = vmatprep.subr.mxu0 0.0
  %131 = vmatpush1.msra.mxu0 0.0
  %132 = vmatprep.subr.mxu0 0.0
  %133 = vmatpush1.msra.mxu0 0.0
  %134 = vmatprep.subr.mxu0 0.0
  %135 = vmatpush1.msra.mxu0 0.0
  %136 = vmatprep.subr.mxu0 0.0
  %137 = vmatpush1.msra.mxu0 0.0
  %138 = vmatprep.subr.mxu0 0.0
  %139 = vmatpush1.msra.mxu0 0.0
  %140 = vmatprep.subr.mxu0 0.0
  %141 = vmatpush1.msra.mxu0 0.0
  %142 = vmatprep.subr.mxu0 0.0
  %143 = vmatpush1.msra.mxu0 0.0
  %144 = vmatprep.subr.mxu0 0.0
  %145 = vmatpush1.msra.mxu0 %v108
  %146 = vmatprep.subr.mxu0 0.0
  %147 = vmatpush1.msra.mxu0 %v107
  %148 = vmatprep.subr.mxu0 0.0
  %149 = vmatpush1.msra.mxu0 %v106
  %150 = vmatprep.subr.mxu0 0.0
  %151 = vmatpush1.msra.mxu0 %v105
  %152 = vmatprep.subr.mxu0 0.0
  %153 = vmatpush2.msra.mxu0 0.0
  %154 = vmatprep.subr.mxu0 0.0
  %155 = vmatpush2.msra.mxu0 0.0
  %156 = vmatprep.subr.mxu0 0.0
  %157 = vmatpush2.msra.mxu0 0.0
  %158 = vmatprep.subr.mxu0 0.0
  %159 = vmatpush2.msra.mxu0 0.0
  %160 = vmatprep.subr.mxu0 0.0
  %161 = vmatpush2.msra.mxu0 0.0
  %162 = vmatprep.subr.mxu0 0.0
  %163 = vmatpush2.msra.mxu0 0.0
  %164 = vmatprep.subr.mxu0 0.0
  %165 = vmatpush2.msra.mxu0 0.0
  %166 = vmatprep.subr.mxu0 0.0
  %167 = vmatpush2.msra.mxu0 0.0
  %168 = vmatprep.subr.mxu0 0.0
  %169 = vmatpush2.msra.mxu0 0.0
  %170 = vmatprep.subr.mxu0 0.0
  %171 = vmatpush2.msra.mxu0 0.0
  %172 = vmatprep.subr.mxu0 0.0
  %173 = vmatpush2.msra.mxu0 0.0
  %174 = vmatprep.subr.mxu0 0.0
  %175 = vmatpush2.msra.mxu0 0.0
  %176 = vmatprep.subr.mxu0 0.0
  %177 = vmatpush2.msra.mxu0 0.0
  %178 = vmatprep.subr.mxu0 0.0
  %179 = vmatpush2.msra.mxu0 0.0
  %180 = vmatprep.subr.mxu0 0.0
  %181 = vmatpush2.msra.mxu0 0.0
  %182 = vmatprep.subr.mxu0 0.0
  %183 = vmatpush2.msra.mxu0 0.0
  %184 = vmatprep.mubr.f32.mxu0 0.0
  %185 = vmatmul.mubr.f32.gmra.mxu0 %v118
  %v186 = vpop.f32.mrf.mxu0
  %v187 = vadd.f32 %v114, %v186
  %v188 = vpop.f32.mrf.mxu0
  %189 = vdwg.mxu0
  %vm190 = vcmask 31744
  %v191 = vsel %vm190, %v187, -inf
  %192 = vmax.xlane.f32.xlu0 %v191
  %v193 = vpop.xlane.xlu0 %192
  %v194 = vsub.f32 %v187, %v193
  %v195 = vmul.f32 %v194, 1.442695
  %v196 = vpow.pop %v195
  %v197 = vsel %vm190, %v196, 0.0
  %198 = vadd.xlane.f32.xlu0 %v197
  %v199 = vpop.xlane.xlu0 %198
  %v200 = vrcp.pop %v199
  %v201 = vmul.f32 %v196, %v200
  %202 = vst.msk [vmem:[%s5] sm:$0xff] %vm190, %v201
  // Predicated region
  $region22: #{tpu_custom_call.1} parent=0 // pred_check
    _
  $region23: #{tpu_custom_call.1} parent=0 // pred_check_branch
    %204 = sbr.rel (0) target = $region25
  $region24: #{tpu_custom_call.1} parent=0 // pred_region
    _
  $region25: #{tpu_custom_call.1} parent=0 // pred_fallthru
    _
  // Predicated region
  $region26: #{tpu_custom_call.1} parent=0 // pred_check
    _
  $region27: #{tpu_custom_call.1} parent=0 // pred_check_branch
    %206 = sbr.rel (0) target = $region29
  $region28: #{tpu_custom_call.1} parent=0 // pred_region
    _
  $region29: #{tpu_custom_call.1} parent=0 // pred_fallthru
    _

</llo_original>
